<compile_context>
chip_gen: v7x
topology: tpu7x:2x2x1
jax: 0.10.0
libtpu: 0.0.40
codegen_flags: <defaults>
</compile_context>

<pallas_src>
import jax
import jax.numpy as jnp
import numpy as np
from jax.experimental import pallas as pl
from jax.experimental.pallas import tpu as pltpu

# ----------------------------- model config ---------------------------------
VOCAB = 50          # inp_size
EMB = 32            # emb_size
HID = 32            # Target_tensor (hidden size)
NUM_LAYERS = 2      # num_layers
RNN_TYPE = "GRU"

# packed-weight layout and layer stacking both require EMB == HID
assert EMB == HID, "Encoder kernel assumes emb_size == hidden_size"


# ------------------------------ Pallas kernel -------------------------------
def gru_encoder_kernel(tok_ref,      # SMEM scalar prefetch: token id (unused in body)
                       emb_ref,      # (1, 1, EMB)               selected embedding row
                       h0_ref,       # (L, 1, HID)               previous hidden (all layers)
                       w_ref,        # (L, EMB+HID, 4*HID)       packed [Wih|Whh] weights
                       b_ref,        # (L, 1, 4*HID)             packed bias
                       hout_ref,     # (L, 1, HID)               new hidden (aliased w/ h0)
                       out_ref):     # (1, 1, HID)               top-layer output
    del tok_ref  # consumed only by the embedding index_map
    H = HID
    # Dropout on the embedding / between layers == identity (inference).
    x = emb_ref[0]                                        # (1, EMB)
    for l in range(NUM_LAYERS):                           # static, unrolled
        h = h0_ref[l]                                     # (1, HID)
        xh = jnp.concatenate([x, h], axis=-1)             # (1, EMB + HID)
        # One fused (1,64) @ (64,128) MXU pass per layer; result is one
        # lane-dense 128-wide row: [r | z | gi_n | gh_n].
        g = jnp.dot(xh, w_ref[l],
                    preferred_element_type=jnp.float32) + b_ref[l]
        r = jax.nn.sigmoid(g[:, 0 * H:1 * H])
        z = jax.nn.sigmoid(g[:, 1 * H:2 * H])
        n = jnp.tanh(g[:, 2 * H:3 * H] + r * g[:, 3 * H:4 * H])
        h_new = (1.0 - z) * n + z * h                     # (1, HID)
        hout_ref[l] = h_new
        x = h_new
    out_ref[0] = x                                        # single final store


# ------------------------- host-side weight packing --------------------------
def pack_gru_params(wih_t, whh_t, bih, bhh):
    """Fuse the two GRU matmuls into one (EMB+HID, 4*HID) weight per layer.

    Columns:
      [0:H)    r gate:  Wih_r stacked over Whh_r,  bias bih_r + bhh_r
      [H:2H)   z gate:  Wih_z stacked over Whh_z,  bias bih_z + bhh_z
      [2H:3H)  gi_n  :  Wih_n only (Whh rows zero), bias bih_n
      [3H:4H)  gh_n  :  Whh_n only (Wih rows zero), bias bhh_n
    """
    L = wih_t.shape[0]
    H = HID
    zeros_i = jnp.zeros((L, EMB, H), jnp.float32)
    zeros_h = jnp.zeros((L, HID, H), jnp.float32)
    top = jnp.concatenate([wih_t[:, :, 0:H], wih_t[:, :, H:2 * H],
                           wih_t[:, :, 2 * H:3 * H], zeros_i], axis=-1)
    bot = jnp.concatenate([whh_t[:, :, 0:H], whh_t[:, :, H:2 * H],
                           zeros_h, whh_t[:, :, 2 * H:3 * H]], axis=-1)
    w_packed = jnp.concatenate([top, bot], axis=1)        # (L, EMB+HID, 4H)
    b_packed = jnp.concatenate(
        [bih[:, :, 0:H] + bhh[:, :, 0:H],
         bih[:, :, H:2 * H] + bhh[:, :, H:2 * H],
         bih[:, :, 2 * H:3 * H],
         bhh[:, :, 2 * H:3 * H]], axis=-1)                # (L, 1, 4H)
    return w_packed, b_packed


# --------------------------------- wrapper -----------------------------------
@jax.jit
def encoder_forward(token, hidden, emb_table3, w_packed, b_packed):
    """One Encoder.forward step (GRU branch).

    token:      int32 (1,)                -- scalar-prefetch token id
    hidden:     f32 (L, 1, HID)
    emb_table3: f32 (VOCAB, 1, EMB)
    w_packed:   f32 (L, EMB+HID, 4*HID)
    b_packed:   f32 (L, 1, 4*HID)
    returns (output (1,1,HID), hidden (L,1,HID))
    """
    L = NUM_LAYERS
    grid_spec = pltpu.PrefetchScalarGridSpec(
        num_scalar_prefetch=1,
        grid=(1,),   # single step: all weights VMEM-resident, layers unrolled
        in_specs=[
            # embedding row selected by the prefetched token id
            pl.BlockSpec((1, 1, EMB), lambda i, tok: (tok[0], 0, 0)),
            pl.BlockSpec((L, 1, HID), lambda i, tok: (0, 0, 0)),
            pl.BlockSpec((L, EMB + HID, 4 * HID), lambda i, tok: (0, 0, 0)),
            pl.BlockSpec((L, 1, 4 * HID), lambda i, tok: (0, 0, 0)),
        ],
        out_specs=[
            pl.BlockSpec((L, 1, HID), lambda i, tok: (0, 0, 0)),   # new hidden
            pl.BlockSpec((1, 1, HID), lambda i, tok: (0, 0, 0)),   # output
        ],
    )
    h_out, output = pl.pallas_call(
        gru_encoder_kernel,
        grid_spec=grid_spec,
        out_shape=(
            jax.ShapeDtypeStruct((L, 1, HID), jnp.float32),
            jax.ShapeDtypeStruct((1, 1, HID), jnp.float32),
        ),
        # call args: (token, emb_table3, hidden, w_packed, b_packed)
        # -> hidden (arg index 2, counting the scalar-prefetch arg) aliases output 0
        input_output_aliases={2: 0},
        compiler_params=pltpu.CompilerParams(
            dimension_semantics=("arbitrary",)),
    )(token, emb_table3, hidden, w_packed, b_packed)
    return output, h_out


# ------------------------------ reference (JAX) ------------------------------
def encoder_forward_ref(token, hidden, emb_table3, wih_t, whh_t, bih, bhh):
    x = emb_table3[int(token[0]), 0][None, :]            # (1, EMB)
    hs = []
    for l in range(NUM_LAYERS):
        h = hidden[l]                                    # (1, HID)
        gi = x @ wih_t[l] + bih[l]
        gh = h @ whh_t[l] + bhh[l]
        H = HID
        r = jax.nn.sigmoid(gi[:, :H] + gh[:, :H])
        z = jax.nn.sigmoid(gi[:, H:2 * H] + gh[:, H:2 * H])
        n = jnp.tanh(gi[:, 2 * H:] + r * gh[:, 2 * H:])
        h_new = (1.0 - z) * n + z * h
        hs.append(h_new)
        x = h_new
    return x[None, :, :], jnp.stack(hs, axis=0)


# ---------------------------------- main -------------------------------------
if __name__ == "__main__":
    key = jax.random.PRNGKey(0)
    ks = jax.random.split(key, 8)
    scale = 1.0 / np.sqrt(HID)

    # Deterministic parameter init (shapes follow nn.Embedding / nn.GRU,
    # with W_ih / W_hh pre-transposed and gates ordered [r|z|n]).
    emb_table = jax.random.uniform(ks[0], (VOCAB, EMB), jnp.float32, -scale, scale)
    emb_table3 = emb_table.reshape(VOCAB, 1, EMB)
    wih_t = jax.random.uniform(ks[1], (NUM_LAYERS, EMB, 3 * HID), jnp.float32, -scale, scale)
    whh_t = jax.random.uniform(ks[2], (NUM_LAYERS, HID, 3 * HID), jnp.float32, -scale, scale)
    bih = jax.random.uniform(ks[3], (NUM_LAYERS, 1, 3 * HID), jnp.float32, -scale, scale)
    bhh = jax.random.uniform(ks[4], (NUM_LAYERS, 1, 3 * HID), jnp.float32, -scale, scale)

    # One-time host-side packing (outside the hot path).
    w_packed, b_packed = pack_gru_params(wih_t, whh_t, bih, bhh)
    w_packed, b_packed = jax.block_until_ready((w_packed, b_packed))

    token = jnp.array([7], dtype=jnp.int32)                       # "input"
    hidden0 = jnp.zeros((NUM_LAYERS, 1, HID), jnp.float32)        # initHidden()

    output, hidden = encoder_forward(token, hidden0, emb_table3, w_packed, b_packed)
    jax.block_until_ready((output, hidden))

    out_ref, hid_ref = encoder_forward_ref(token, hidden0, emb_table3,
                                           wih_t, whh_t, bih, bhh)
    np.testing.assert_allclose(np.asarray(output), np.asarray(out_ref),
                               rtol=1e-2, atol=1e-3)
    np.testing.assert_allclose(np.asarray(hidden), np.asarray(hid_ref),
                               rtol=1e-2, atol=1e-3)

    assert output.shape == (1, 1, HID) and hidden.shape == (NUM_LAYERS, 1, HID)
    print("KERNEL_OK")
</pallas_src>

<mosaic_0001>
module attributes {stable_mosaic.version = 11 : i64} {
  func.func @gru_encoder_kernel(%arg0: i32, %arg1: memref<1xi32, #tpu.memory_space<smem>>, %arg2: memref<1x1x32xf32, #tpu.memory_space<vmem>>, %arg3: memref<2x1x32xf32, #tpu.memory_space<vmem>>, %arg4: memref<2x64x128xf32, #tpu.memory_space<vmem>>, %arg5: memref<2x1x128xf32, #tpu.memory_space<vmem>>, %arg6: memref<2x1x32xf32, #tpu.memory_space<vmem>>, %arg7: memref<1x1x32xf32, #tpu.memory_space<vmem>>) attributes {dimension_semantics = [#tpu.dimension_semantics<arbitrary>], iteration_bounds = array<i64: 1>, scalar_prefetch = 1 : i64, scratch_operands = 0 : i64, tpu.core_type = #tpu.core_type<tc>, window_params = [{transform_indices = @transform_0, window_bounds = array<i64: 1, 1, 32>}, {pipeline_mode = #tpu.pipeline_mode<synchronous>, transform_indices = @transform_1, window_bounds = array<i64: 2, 1, 32>}, {pipeline_mode = #tpu.pipeline_mode<synchronous>, transform_indices = @transform_2, window_bounds = array<i64: 2, 64, 128>}, {pipeline_mode = #tpu.pipeline_mode<synchronous>, transform_indices = @transform_3, window_bounds = array<i64: 2, 1, 128>}, {pipeline_mode = #tpu.pipeline_mode<synchronous>, transform_indices = @transform_4, window_bounds = array<i64: 2, 1, 32>}, {pipeline_mode = #tpu.pipeline_mode<synchronous>, transform_indices = @transform_5, window_bounds = array<i64: 1, 1, 32>}]} {
    %c0 = arith.constant 0 : index
    %c0_0 = arith.constant 0 : index
    %c0_1 = arith.constant 0 : index
    %0 = vector.load %arg2[%c0, %c0_0, %c0_1] : memref<1x1x32xf32, #tpu.memory_space<vmem>>, vector<1x1x32xf32>
    %1 = vector.shape_cast %0 : vector<1x1x32xf32> to vector<1x32xf32>
    %c0_2 = arith.constant 0 : index
    %c0_3 = arith.constant 0 : index
    %c0_4 = arith.constant 0 : index
    %2 = vector.load %arg3[%c0_2, %c0_3, %c0_4] : memref<2x1x32xf32, #tpu.memory_space<vmem>>, vector<1x1x32xf32>
    %3 = vector.shape_cast %2 : vector<1x1x32xf32> to vector<1x32xf32>
    %4 = tpu.concatenate %1, %3 in 1 : vector<1x32xf32>, vector<1x32xf32> -> vector<1x64xf32>
    %c0_5 = arith.constant 0 : index
    %c0_6 = arith.constant 0 : index
    %c0_7 = arith.constant 0 : index
    %5 = vector.load %arg4[%c0_5, %c0_6, %c0_7] : memref<2x64x128xf32, #tpu.memory_space<vmem>>, vector<1x64x128xf32>
    %6 = vector.shape_cast %5 : vector<1x64x128xf32> to vector<64x128xf32>
    %cst = arith.constant dense<0.000000e+00> : vector<1x128xf32>
    %7 = tpu.matmul %4, %6, %cst {dimension_numbers = #tpu.dot_dimension_numbers<[1], [0], [0], [1], [0, 0, 1, 1], [], []>} : vector<1x64xf32>, vector<64x128xf32>, vector<1x128xf32> -> vector<1x128xf32>
    %c0_8 = arith.constant 0 : index
    %c0_9 = arith.constant 0 : index
    %c0_10 = arith.constant 0 : index
    %8 = vector.load %arg5[%c0_8, %c0_9, %c0_10] : memref<2x1x128xf32, #tpu.memory_space<vmem>>, vector<1x1x128xf32>
    %9 = vector.shape_cast %8 : vector<1x1x128xf32> to vector<1x128xf32>
    %10 = arith.addf %7, %9 : vector<1x128xf32>
    %11 = vector.extract_strided_slice %10 {offsets = [0, 0], sizes = [1, 32], strides = [1, 1]} : vector<1x128xf32> to vector<1x32xf32>
    %12 = arith.negf %11 : vector<1x32xf32>
    %13 = math.exp %12 : vector<1x32xf32>
    %cst_11 = arith.constant 1.000000e+00 : f32
    %14 = vector.broadcast %cst_11 : f32 to vector<1x32xf32>
    %15 = arith.addf %14, %13 : vector<1x32xf32>
    %16 = arith.divf %14, %15 : vector<1x32xf32>
    %17 = vector.extract_strided_slice %10 {offsets = [0, 32], sizes = [1, 32], strides = [1, 1]} : vector<1x128xf32> to vector<1x32xf32>
    %18 = arith.negf %17 : vector<1x32xf32>
    %19 = math.exp %18 : vector<1x32xf32>
    %cst_12 = arith.constant 1.000000e+00 : f32
    %20 = vector.broadcast %cst_12 : f32 to vector<1x32xf32>
    %21 = arith.addf %20, %19 : vector<1x32xf32>
    %22 = arith.divf %20, %21 : vector<1x32xf32>
    %23 = vector.extract_strided_slice %10 {offsets = [0, 64], sizes = [1, 32], strides = [1, 1]} : vector<1x128xf32> to vector<1x32xf32>
    %24 = vector.extract_strided_slice %10 {offsets = [0, 96], sizes = [1, 32], strides = [1, 1]} : vector<1x128xf32> to vector<1x32xf32>
    %25 = arith.mulf %16, %24 : vector<1x32xf32>
    %26 = arith.addf %23, %25 : vector<1x32xf32>
    %27 = math.tanh %26 : vector<1x32xf32>
    %cst_13 = arith.constant 1.000000e+00 : f32
    %28 = vector.broadcast %cst_13 : f32 to vector<1x32xf32>
    %29 = arith.subf %28, %22 : vector<1x32xf32>
    %30 = arith.mulf %29, %27 : vector<1x32xf32>
    %31 = arith.mulf %22, %3 : vector<1x32xf32>
    %32 = arith.addf %30, %31 : vector<1x32xf32>
    %c0_14 = arith.constant 0 : index
    %c0_15 = arith.constant 0 : index
    %c0_16 = arith.constant 0 : index
    %33 = vector.load %arg6[%c0_14, %c0_15, %c0_16] : memref<2x1x32xf32, #tpu.memory_space<vmem>>, vector<1x1x32xf32>
    %34 = vector.shape_cast %33 : vector<1x1x32xf32> to vector<1x32xf32>
    %35 = vector.shape_cast %32 : vector<1x32xf32> to vector<1x1x32xf32>
    tpu.vector_store %arg6[%c0_14, %c0_15, %c0_16], %35 {strides = array<i32>} : memref<2x1x32xf32, #tpu.memory_space<vmem>>, vector<1x1x32xf32>,
    %c1 = arith.constant 1 : index
    %c0_17 = arith.constant 0 : index
    %c0_18 = arith.constant 0 : index
    %36 = vector.load %arg3[%c1, %c0_17, %c0_18] : memref<2x1x32xf32, #tpu.memory_space<vmem>>, vector<1x1x32xf32>
    %37 = vector.shape_cast %36 : vector<1x1x32xf32> to vector<1x32xf32>
    %38 = tpu.concatenate %32, %37 in 1 : vector<1x32xf32>, vector<1x32xf32> -> vector<1x64xf32>
    %c1_19 = arith.constant 1 : index
    %c0_20 = arith.constant 0 : index
    %c0_21 = arith.constant 0 : index
    %39 = vector.load %arg4[%c1_19, %c0_20, %c0_21] : memref<2x64x128xf32, #tpu.memory_space<vmem>>, vector<1x64x128xf32>
    %40 = vector.shape_cast %39 : vector<1x64x128xf32> to vector<64x128xf32>
    %cst_22 = arith.constant dense<0.000000e+00> : vector<1x128xf32>
    %41 = tpu.matmul %38, %40, %cst_22 {dimension_numbers = #tpu.dot_dimension_numbers<[1], [0], [0], [1], [0, 0, 1, 1], [], []>} : vector<1x64xf32>, vector<64x128xf32>, vector<1x128xf32> -> vector<1x128xf32>
    %c1_23 = arith.constant 1 : index
    %c0_24 = arith.constant 0 : index
    %c0_25 = arith.constant 0 : index
    %42 = vector.load %arg5[%c1_23, %c0_24, %c0_25] : memref<2x1x128xf32, #tpu.memory_space<vmem>>, vector<1x1x128xf32>
    %43 = vector.shape_cast %42 : vector<1x1x128xf32> to vector<1x128xf32>
    %44 = arith.addf %41, %43 : vector<1x128xf32>
    %45 = vector.extract_strided_slice %44 {offsets = [0, 0], sizes = [1, 32], strides = [1, 1]} : vector<1x128xf32> to vector<1x32xf32>
    %46 = arith.negf %45 : vector<1x32xf32>
    %47 = math.exp %46 : vector<1x32xf32>
    %cst_26 = arith.constant 1.000000e+00 : f32
    %48 = vector.broadcast %cst_26 : f32 to vector<1x32xf32>
    %49 = arith.addf %48, %47 : vector<1x32xf32>
    %50 = arith.divf %48, %49 : vector<1x32xf32>
    %51 = vector.extract_strided_slice %44 {offsets = [0, 32], sizes = [1, 32], strides = [1, 1]} : vector<1x128xf32> to vector<1x32xf32>
    %52 = arith.negf %51 : vector<1x32xf32>
    %53 = math.exp %52 : vector<1x32xf32>
    %cst_27 = arith.constant 1.000000e+00 : f32
    %54 = vector.broadcast %cst_27 : f32 to vector<1x32xf32>
    %55 = arith.addf %54, %53 : vector<1x32xf32>
    %56 = arith.divf %54, %55 : vector<1x32xf32>
    %57 = vector.extract_strided_slice %44 {offsets = [0, 64], sizes = [1, 32], strides = [1, 1]} : vector<1x128xf32> to vector<1x32xf32>
    %58 = vector.extract_strided_slice %44 {offsets = [0, 96], sizes = [1, 32], strides = [1, 1]} : vector<1x128xf32> to vector<1x32xf32>
    %59 = arith.mulf %50, %58 : vector<1x32xf32>
    %60 = arith.addf %57, %59 : vector<1x32xf32>
    %61 = math.tanh %60 : vector<1x32xf32>
    %cst_28 = arith.constant 1.000000e+00 : f32
    %62 = vector.broadcast %cst_28 : f32 to vector<1x32xf32>
    %63 = arith.subf %62, %56 : vector<1x32xf32>
    %64 = arith.mulf %63, %61 : vector<1x32xf32>
    %65 = arith.mulf %56, %37 : vector<1x32xf32>
    %66 = arith.addf %64, %65 : vector<1x32xf32>
    %c1_29 = arith.constant 1 : index
    %c0_30 = arith.constant 0 : index
    %c0_31 = arith.constant 0 : index
    %67 = vector.load %arg6[%c1_29, %c0_30, %c0_31] : memref<2x1x32xf32, #tpu.memory_space<vmem>>, vector<1x1x32xf32>
    %68 = vector.shape_cast %67 : vector<1x1x32xf32> to vector<1x32xf32>
    %69 = vector.shape_cast %66 : vector<1x32xf32> to vector<1x1x32xf32>
    tpu.vector_store %arg6[%c1_29, %c0_30, %c0_31], %69 {strides = array<i32>} : memref<2x1x32xf32, #tpu.memory_space<vmem>>, vector<1x1x32xf32>,
    %c0_32 = arith.constant 0 : index
    %c0_33 = arith.constant 0 : index
    %c0_34 = arith.constant 0 : index
    %70 = vector.load %arg7[%c0_32, %c0_33, %c0_34] : memref<1x1x32xf32, #tpu.memory_space<vmem>>, vector<1x1x32xf32>
    %71 = vector.shape_cast %70 : vector<1x1x32xf32> to vector<1x32xf32>
    %72 = vector.shape_cast %66 : vector<1x32xf32> to vector<1x1x32xf32>
    tpu.vector_store %arg7[%c0_32, %c0_33, %c0_34], %72 {strides = array<i32>} : memref<1x1x32xf32, #tpu.memory_space<vmem>>, vector<1x1x32xf32>,
    return
  }
  func.func @transform_0(%arg0: i32, %arg1: memref<1xi32, #tpu.memory_space<smem>>) -> (i32, i32, i32) {
    %c0 = arith.constant 0 : index
    %0 = memref.load %arg1[%c0] : memref<1xi32, #tpu.memory_space<smem>>
    %c0_i32 = arith.constant 0 : i32
    %c0_i32_0 = arith.constant 0 : i32
    %c0_i32_1 = arith.constant 0 : i32
    return %0, %c0_i32, %c0_i32_0 : i32, i32, i32
  }
  func.func @transform_1(%arg0: i32, %arg1: memref<1xi32, #tpu.memory_space<smem>>) -> (i32, i32, i32) {
    %c0_i32 = arith.constant 0 : i32
    %c0_i32_0 = arith.constant 0 : i32
    %c0_i32_1 = arith.constant 0 : i32
    %c0_i32_2 = arith.constant 0 : i32
    return %c0_i32, %c0_i32_0, %c0_i32_1 : i32, i32, i32
  }
  func.func @transform_2(%arg0: i32, %arg1: memref<1xi32, #tpu.memory_space<smem>>) -> (i32, i32, i32) {
    %c0_i32 = arith.constant 0 : i32
    %c0_i32_0 = arith.constant 0 : i32
    %c0_i32_1 = arith.constant 0 : i32
    %c0_i32_2 = arith.constant 0 : i32
    return %c0_i32, %c0_i32_0, %c0_i32_1 : i32, i32, i32
  }
  func.func @transform_3(%arg0: i32, %arg1: memref<1xi32, #tpu.memory_space<smem>>) -> (i32, i32, i32) {
    %c0_i32 = arith.constant 0 : i32
    %c0_i32_0 = arith.constant 0 : i32
    %c0_i32_1 = arith.constant 0 : i32
    %c0_i32_2 = arith.constant 0 : i32
    return %c0_i32, %c0_i32_0, %c0_i32_1 : i32, i32, i32
  }
  func.func @transform_4(%arg0: i32, %arg1: memref<1xi32, #tpu.memory_space<smem>>) -> (i32, i32, i32) {
    %c0_i32 = arith.constant 0 : i32
    %c0_i32_0 = arith.constant 0 : i32
    %c0_i32_1 = arith.constant 0 : i32
    %c0_i32_2 = arith.constant 0 : i32
    return %c0_i32, %c0_i32_0, %c0_i32_1 : i32, i32, i32
  }
  func.func @transform_5(%arg0: i32, %arg1: memref<1xi32, #tpu.memory_space<smem>>) -> (i32, i32, i32) {
    %c0_i32 = arith.constant 0 : i32
    %c0_i32_0 = arith.constant 0 : i32
    %c0_i32_1 = arith.constant 0 : i32
    %c0_i32_2 = arith.constant 0 : i32
    return %c0_i32, %c0_i32_0, %c0_i32_1 : i32, i32, i32
  }
}

</mosaic_0001>

<llo_original>
// kernel: encoder_forward.1
$region0: #{encoder_forward.1}
  #allocation0 [shape = 'u32[]', space=smem, size = 0x4, offset = 0x4, fixed_abs, tag = 'smem constant byte address 0x4 - core index']
  #allocation1 [shape = 'u32[144,128]{1,0:T(1,128)}', space=vmem, size = 0x12000, scoped, tag = 'internal scratch']
  #allocation2 [shape = 's32[1]{0}', space=sflag, size = 0x4, scoped, tag = 'scoped memory for encoder_forward.1']
  #allocation3 [shape = 's32[1]{0:T(128)S(6)}', space=smem, size = 0x200, scoped, tag = 'prefetched SMEM operand 0']
  %s0 = inlined_call_operand.<no memory space> [shape: s32[1], index: 0, kind: input, shape index: {}]
  %s1 = inlined_call_operand.vmem [shape: f32[50,1,32], index: 1, kind: input, shape index: {}]
  %s2 = inlined_call_operand.vmem [shape: f32[2,1,32], index: 2, kind: input, shape index: {}, may-alias: {2,5}]
  %s3 = inlined_call_operand.hbm [shape: f32[2,64,128], index: 3, kind: input, shape index: {}]
  %s4 = inlined_call_operand.vmem [shape: f32[2,1,128], index: 4, kind: input, shape index: {}]
  %s5 = inlined_call_operand.vmem [shape: f32[2,1,32], index: 5, kind: output, shape index: {0}, may-alias: {2,5}]
  %s6 = inlined_call_operand.hbm [shape: f32[1,1,32], index: 6, kind: output, shape index: {1}]
  %7 = xla_tuple %s5, %s6
  %s8 = sld [smem:[#allocation0]]
  $region38: #{encoder_forward.1} parent=0
    _
  %s10 = ssub.s32 1, %s8
  %s11 = scalar_select 0, %s10, %s8
  %12 = sst [smem:[#allocation3]] %s0
  $region1: #{encoder_forward.1} parent=0
    #allocation4 [shape = 'u8[65536]{0}', space=vmem, size = 0x10000, scoped, tag = 'input window, operand 3, single buffered']
    #allocation5 [shape = 's32[1]{0}', space=sflag, size = 0x4, scoped, tag = 'scoped memory for encoder_forward.1']
    #allocation6 [shape = 's32[1]{0}', space=sflag, size = 0x4, scoped, tag = 'scoped memory for encoder_forward.1']
    #allocation7 [shape = 'u8[512]{0}', space=vmem, size = 0x400, scoped, tag = 'output window, operand 1, single buffered']
    %13 = vsyncpa [#allocation5], 0
    %14 = vsyncpa [#allocation6], 0
    // Predicated region
    $region2: #{encoder_forward.1} parent=1 // pred_check
      _
    $region3: #{encoder_forward.1} parent=1 // pred_check_branch
      %16 = sbr.rel (0) target = $region5
    $region4: #{encoder_forward.1} parent=1 // pred_region
      %s17 = sld [smem:[#allocation3]]
      %p18 = scmp.lt.s32.totalorder %s17, 49
      %s19 = scalar_select %p18, %s17, 49
      %s20 = scalar_lea.vmem %s1, %s19
      %s21 = sld [smem:[#allocation3]]
    $region5: #{encoder_forward.1} parent=1 // pred_fallthru
      _
    // Predicated region
    $region6: #{encoder_forward.1} parent=1 // pred_check
      _
    $region7: #{encoder_forward.1} parent=1 // pred_check_branch
      %23 = sbr.rel (0) target = $region9
    $region8: #{encoder_forward.1} parent=1 // pred_region
      _
    $region9: #{encoder_forward.1} parent=1 // pred_fallthru
      _
    // Predicated region
    $region10: #{encoder_forward.1} parent=1 // pred_check
      _
    $region11: #{encoder_forward.1} parent=1 // pred_check_branch
      %25 = sbr.rel (0) target = $region13
    $region12: #{encoder_forward.1} parent=1 // pred_region
      %s27 = ssub.s32 2048, 2048
      %28 = vsyncadd [#allocation5], %s27
      %s29 = sshll.u32 [#allocation4], 4
      %s30 = int_to_ptr.vmem [resolvable:$true] %s29
      %35 = dma.hbm_to_vmem [thread:$0]  %s3, 2048, %s30, [#allocation5], 128, 128, 8
    $region13: #{encoder_forward.1} parent=1 // pred_fallthru
      _
    // Predicated region
    $region14: #{encoder_forward.1} parent=1 // pred_check
      _
    $region15: #{encoder_forward.1} parent=1 // pred_check_branch
      %37 = sbr.rel (0) target = $region17
    $region16: #{encoder_forward.1} parent=1 // pred_region
      _
    $region17: #{encoder_forward.1} parent=1 // pred_fallthru
      _
    // Predicated region
    $region18: #{encoder_forward.1} parent=1 // pred_check
      _
    $region19: #{encoder_forward.1} parent=1 // pred_check_branch
      %39 = sbr.rel (0) target = $region21
    $region20: #{encoder_forward.1} parent=1 // pred_region
      %40 = dma.done [#allocation5], 2048
    $region21: #{encoder_forward.1} parent=1 // pred_fallthru
      _
    %s41 = sld [smem:[#allocation3]]
    %p42 = scmp.lt.s32.totalorder %s41, 49
    %s43 = scalar_select %p42, %s41, 49
    %s44 = scalar_lea.vmem %s1, %s43
    %s45 = sld [smem:[#allocation3]]
    %p46 = scmp.lt.s32.totalorder %s45, 49
    %s47 = scalar_select %p46, %s45, 49
    %s48 = scalar_lea.vmem %s1, %s47
    %s49 = sld [smem:[#allocation3]]
    %v50 = vld [vmem:[%s48] sm:$0x1]
    %v51 = vld [vmem:[%s2] sm:$0x1]
    %v53 = vlaneseq
    %v54 = vshrl.u32 %v53, 7
    %v55 = vsub.s32 0, %v54
    %v56 = vrot.slane %v51, %v55
    %57 = vrot.lane.b32.xlu0 %v56, 32
    %v58 = vpop.permute.xlu0 %57
    %vm60 = vcmask 261120
    %v61 = vsel %vm60, %v50, %v58
    %v62 = vld [vmem:[#allocation4] sm:$0xff]
    %v63 = vld [vmem:[#allocation4 + $0x8] sm:$0xff]
    %v64 = vld [vmem:[#allocation4 + $0x10] sm:$0xff]
    %v65 = vld [vmem:[#allocation4 + $0x18] sm:$0xff]
    %v66 = vld [vmem:[#allocation4 + $0x20] sm:$0xff]
    %v67 = vld [vmem:[#allocation4 + $0x28] sm:$0xff]
    %v68 = vld [vmem:[#allocation4 + $0x30] sm:$0xff]
    %v69 = vld [vmem:[#allocation4 + $0x38] sm:$0xff]
    %v70 = vld [vmem:[%s4] sm:$0x1]
    %vm71 = vcmask 523264
    %v73 = vsel %vm71, %v61, 0
    %75 = vmatprep.subr.mxu0 0.0
    %76 = vmatpush1.msra.mxu0 %v62
    %77 = vmatprep.subr.mxu0 0.0
    %78 = vmatpush1.msra.mxu0 %v63
    %79 = vmatprep.subr.mxu0 0.0
    %80 = vmatpush1.msra.mxu0 %v64
    %81 = vmatprep.subr.mxu0 0.0
    %82 = vmatpush1.msra.mxu0 %v65
    %83 = vmatprep.subr.mxu0 0.0
    %84 = vmatpush1.msra.mxu0 %v66
    %85 = vmatprep.subr.mxu0 0.0
    %86 = vmatpush1.msra.mxu0 %v67
    %87 = vmatprep.subr.mxu0 0.0
    %88 = vmatpush1.msra.mxu0 %v68
    %89 = vmatprep.subr.mxu0 0.0
    %90 = vmatpush1.msra.mxu0 %v69
    %91 = vmatprep.subr.mxu0 0.0
    %92 = vmatpush1.msra.mxu0 0.0
    %93 = vmatprep.subr.mxu0 0.0
    %94 = vmatpush1.msra.mxu0 0.0
    %95 = vmatprep.subr.mxu0 0.0
    %96 = vmatpush1.msra.mxu0 0.0
    %97 = vmatprep.subr.mxu0 0.0
    %98 = vmatpush1.msra.mxu0 0.0
    %99 = vmatprep.subr.mxu0 0.0
    %100 = vmatpush1.msra.mxu0 0.0
    %101 = vmatprep.subr.mxu0 0.0
    %102 = vmatpush1.msra.mxu0 0.0
    %103 = vmatprep.subr.mxu0 0.0
    %104 = vmatpush1.msra.mxu0 0.0
    %105 = vmatprep.subr.mxu0 0.0
    %106 = vmatpush1.msra.mxu0 0.0
    %107 = vmatprep.subr.mxu0 0.0
    %108 = vmatpush1.msra.mxu0 0.0
    %109 = vmatprep.subr.mxu0 0.0
    %110 = vmatpush1.msra.mxu0 0.0
    %111 = vmatprep.subr.mxu0 0.0
    %112 = vmatpush1.msra.mxu0 0.0
    %113 = vmatprep.subr.mxu0 0.0
    %114 = vmatpush1.msra.mxu0 0.0
    %115 = vmatprep.subr.mxu0 0.0
    %116 = vmatpush1.msra.mxu0 0.0
    %117 = vmatprep.subr.mxu0 0.0
    %118 = vmatpush1.msra.mxu0 0.0
    %119 = vmatprep.subr.mxu0 0.0
    %120 = vmatpush1.msra.mxu0 0.0
    %121 = vmatprep.subr.mxu0 0.0
    %122 = vmatpush1.msra.mxu0 0.0
    %123 = vmatprep.subr.mxu0 0.0
    %124 = vmatpush1.msra.mxu0 0.0
    %125 = vmatprep.subr.mxu0 0.0
    %126 = vmatpush1.msra.mxu0 0.0
    %127 = vmatprep.subr.mxu0 0.0
    %128 = vmatpush1.msra.mxu0 0.0
    %129 = vmatprep.subr.mxu0 0.0
    %130 = vmatpush1.msra.mxu0 0.0
    %131 = vmatprep.subr.mxu0 0.0
    %132 = vmatpush1.msra.mxu0 0.0
    %133 = vmatprep.subr.mxu0 0.0
    %134 = vmatpush1.msra.mxu0 0.0
    %135 = vmatprep.subr.mxu0 0.0
    %136 = vmatpush1.msra.mxu0 0.0
    %137 = vmatprep.subr.mxu0 0.0
    %138 = vmatpush1.msra.mxu0 0.0
    %139 = vmatprep.mubr.f32.mxu0 0.0
    %140 = vmatmul.mubr.f32.gmra.mrb[0].mxu0 %v73
    %v141 = vpop.f32.mrb[0].mxu0
    %v142 = vadd.f32 %v70, %v141
    %v143 = vpop.f32.mrb[0].mxu0
    %144 = vdwg.mxu0
    %v145 = vxor.u32 %v142, 2147483648
    %v146 = vmul.f32 %v145, 1.442695
    %v147 = vpow.pop %v146
    %v148 = vadd.f32 %v147, 1.0
    %v149 = vrcp.pop %v148
    %v150 = vmul.f32 1.0, %v149
    %152 = vrot.lane.b32.xlu0 %v142, 32
    %v153 = vpop.permute.xlu0 %152
    %v155 = vmul.f32 %v150, %v153
    %157 = vrot.lane.b32.xlu0 %v155, 64
    %v158 = vpop.permute.xlu0 %157
    %v160 = vadd.f32 %v142, %v158
    %v161 = vtanh.pop %v160
    %v162 = vsub.f32 1.0, %v150
    %164 = vrot.lane.b32.xlu0 %v161, 96
    %v165 = vpop.permute.xlu0 %164
    %v167 = vmul.f32 %v162, %v165
    %v168 = vmul.f32 %v150, %v58
    %v169 = vadd.f32 %v167, %v168
    %171 = vrot.lane.b32.xlu0 %v169, 96
    %v172 = vpop.permute.xlu0 %171
    %vm174 = vcmask 253952
    %175 = vst.msk [vmem:[%s5] sm:$0x1] %vm174, %v172
    %s176 = scalar_lea.vmem %s2, 1
    %v177 = vld [vmem:[%s176] sm:$0x1]
    %v179 = vlaneseq
    %v180 = vshrl.u32 %v179, 7
    %v181 = vsub.s32 0, %v180
    %v182 = vrot.slane %v177, %v181
    %183 = vrot.lane.b32.xlu0 %v182, 32
    %v184 = vpop.permute.xlu0 %183
    %v186 = vsel %vm60, %v172, %v184
    %s187 = scalar_lea.vmem [#allocation4], 64
    %v188 = vld [vmem:[%s187] sm:$0xff]
    %v189 = vld [vmem:[%s187 + $0x8] sm:$0xff]
    %v190 = vld [vmem:[%s187 + $0x10] sm:$0xff]
    %v191 = vld [vmem:[%s187 + $0x18] sm:$0xff]
    %v192 = vld [vmem:[%s187 + $0x20] sm:$0xff]
    %v193 = vld [vmem:[%s187 + $0x28] sm:$0xff]
    %v194 = vld [vmem:[%s187 + $0x30] sm:$0xff]
    %v195 = vld [vmem:[%s187 + $0x38] sm:$0xff]
    %s196 = scalar_lea.vmem %s4, 1
    %v197 = vld [vmem:[%s196] sm:$0x1]
    %v199 = vsel %vm71, %v186, 0
    %201 = vmatprep.subr.mxu0 0.0
    %202 = vmatpush1.msra.mxu0 %v188
    %203 = vmatprep.subr.mxu0 0.0
    %204 = vmatpush1.msra.mxu0 %v189
    %205 = vmatprep.subr.mxu0 0.0
    %206 = vmatpush1.msra.mxu0 %v190
    %207 = vmatprep.subr.mxu0 0.0
    %208 = vmatpush1.msra.mxu0 %v191
    %209 = vmatprep.subr.mxu0 0.0
    %210 = vmatpush1.msra.mxu0 %v192
    %211 = vmatprep.subr.mxu0 0.0
    %212 = vmatpush1.msra.mxu0 %v193
    %213 = vmatprep.subr.mxu0 0.0
    %214 = vmatpush1.msra.mxu0 %v194
    %215 = vmatprep.subr.mxu0 0.0
    %216 = vmatpush1.msra.mxu0 %v195
    %217 = vmatprep.subr.mxu0 0.0
    %218 = vmatpush1.msra.mxu0 0.0
    %219 = vmatprep.subr.mxu0 0.0
    %220 = vmatpush1.msra.mxu0 0.0
    %221 = vmatprep.subr.mxu0 0.0
    %222 = vmatpush1.msra.mxu0 0.0
    %223 = vmatprep.subr.mxu0 0.0
    %224 = vmatpush1.msra.mxu0 0.0
    %225 = vmatprep.subr.mxu0 0.0
    %226 = vmatpush1.msra.mxu0 0.0
    %227 = vmatprep.subr.mxu0 0.0
    %228 = vmatpush1.msra.mxu0 0.0
    %229 = vmatprep.subr.mxu0 0.0
    %230 = vmatpush1.msra.mxu0 0.0
    %231 = vmatprep.subr.mxu0 0.0
    %232 = vmatpush1.msra.mxu0 0.0
    %233 = vmatprep.subr.mxu0 0.0
    %234 = vmatpush1.msra.mxu0 0.0
    %235 = vmatprep.subr.mxu0 0.0
    %236 = vmatpush1.msra.mxu0 0.0
    %237 = vmatprep.subr.mxu0 0.0
    %238 = vmatpush1.msra.mxu0 0.0
    %239 = vmatprep.subr.mxu0 0.0
    %240 = vmatpush1.msra.mxu0 0.0
    %241 = vmatprep.subr.mxu0 0.0
    %242 = vmatpush1.msra.mxu0 0.0
    %243 = vmatprep.subr.mxu0 0.0
    %244 = vmatpush1.msra.mxu0 0.0
    %245 = vmatprep.subr.mxu0 0.0
    %246 = vmatpush1.msra.mxu0 0.0
    %247 = vmatprep.subr.mxu0 0.0
    %248 = vmatpush1.msra.mxu0 0.0
    %249 = vmatprep.subr.mxu0 0.0
    %250 = vmatpush1.msra.mxu0 0.0
    %251 = vmatprep.subr.mxu0 0.0
    %252 = vmatpush1.msra.mxu0 0.0
    %253 = vmatprep.subr.mxu0 0.0
    %254 = vmatpush1.msra.mxu0 0.0
    %255 = vmatprep.subr.mxu0 0.0
    %256 = vmatpush1.msra.mxu0 0.0
    %257 = vmatprep.subr.mxu0 0.0
    %258 = vmatpush1.msra.mxu0 0.0
    %259 = vmatprep.subr.mxu0 0.0
    %260 = vmatpush1.msra.mxu0 0.0
    %261 = vmatprep.subr.mxu0 0.0
    %262 = vmatpush1.msra.mxu0 0.0
    %263 = vmatprep.subr.mxu0 0.0
    %264 = vmatpush1.msra.mxu0 0.0
    %265 = vmatprep.mubr.f32.mxu0 0.0
    %266 = vmatmul.mubr.f32.gmra.mrb[0].mxu0 %v199
    %v267 = vpop.f32.mrb[0].mxu0
    %v268 = vadd.f32 %v197, %v267
    %v269 = vpop.f32.mrb[0].mxu0
    %270 = vdwg.mxu0
    %v271 = vxor.u32 %v268, 2147483648
    %v272 = vmul.f32 %v271, 1.442695
    %v273 = vpow.pop %v272
    %v274 = vadd.f32 %v273, 1.0
    %v275 = vrcp.pop %v274
    %v276 = vmul.f32 1.0, %v275
    %278 = vrot.lane.b32.xlu0 %v268, 32
    %v279 = vpop.permute.xlu0 %278
    %v281 = vmul.f32 %v276, %v279
    %283 = vrot.lane.b32.xlu0 %v281, 64
    %v284 = vpop.permute.xlu0 %283
    %v286 = vadd.f32 %v268, %v284
    %v287 = vtanh.pop %v286
    %v288 = vsub.f32 1.0, %v276
    %290 = vrot.lane.b32.xlu0 %v287, 96
    %v291 = vpop.permute.xlu0 %290
    %v293 = vmul.f32 %v288, %v291
    %v294 = vmul.f32 %v276, %v184
    %v295 = vadd.f32 %v293, %v294
    %297 = vrot.lane.b32.xlu0 %v295, 96
    %v298 = vpop.permute.xlu0 %297
    %s300 = scalar_lea.vmem %s5, 1
    %301 = vst.msk [vmem:[%s300] sm:$0x1] %vm174, %v298
    %302 = vst.msk [vmem:[#allocation7] sm:$0x1] %vm174, %v298
    // Predicated region
    $region22: #{encoder_forward.1} parent=1 // pred_check
      _
    $region23: #{encoder_forward.1} parent=1 // pred_check_branch
      %304 = sbr.rel (0) target = $region25
    $region24: #{encoder_forward.1} parent=1 // pred_region
      _
    $region25: #{encoder_forward.1} parent=1 // pred_fallthru
      _
    // Predicated region
    $region26: #{encoder_forward.1} parent=1 // pred_check
      _
    $region27: #{encoder_forward.1} parent=1 // pred_check_branch
      %306 = sbr.rel (0) target = $region29
    $region28: #{encoder_forward.1} parent=1 // pred_region
      %s308 = ssub.s32 16, 16
      %309 = vsyncadd [#allocation6], %s308
      %s311 = sshll.u32 [#allocation7], 4
      %s312 = int_to_ptr.vmem [resolvable:$true] %s311
      %314 = dma.vmem_to_hbm [thread:$0]  %s312, 16, %s6, [#allocation6]
    $region29: #{encoder_forward.1} parent=1 // pred_fallthru
      _
    // Predicated region
    $region30: #{encoder_forward.1} parent=1 // pred_check
      _
    $region31: #{encoder_forward.1} parent=1 // pred_check_branch
      %316 = sbr.rel (0) target = $region33
    $region32: #{encoder_forward.1} parent=1 // pred_region
      _
    $region33: #{encoder_forward.1} parent=1 // pred_fallthru
      _
    // Predicated region
    $region34: #{encoder_forward.1} parent=1 // pred_check
      _
    $region35: #{encoder_forward.1} parent=1 // pred_check_branch
      %318 = sbr.rel (0) target = $region37
    $region36: #{encoder_forward.1} parent=1 // pred_region
      %319 = dma.done [#allocation6], 16
    $region37: #{encoder_forward.1} parent=1 // pred_fallthru
      _
    %320 = vsyncpa [#allocation5], 1
    %321 = vsyncpa [#allocation6], 1

</llo_original>
